<compile_context>
chip_gen: v6e
topology: v6e:2x2x1
jax: 0.10.0
libtpu: 0.0.40
codegen_flags: <defaults>
</compile_context>

<pallas_src>
import functools

import jax
import jax.numpy as jnp
from jax import lax
from jax.experimental import pallas as pl
from jax.experimental.pallas import tpu as pltpu


def _upsample_conv_kernel(xm_ref, xh_ref, w_ref, b_ref, o_ref, *, kernel_size,
                          tile_l):
    # xm_ref: (1, C, tile_l)   aligned window of the upsampled+padded signal
    # xh_ref: (1, C, halo_w)   right halo (the next 128-aligned chunk)
    # w_ref:  (O, K*C)         taps fused along the contraction axis
    # b_ref:  (O, 1)           f32 bias
    # o_ref:  (1, O, tile_l)   lane-dense output tile (last block store-masked)
    xm = xm_ref[0]                                     # (C, tile_l)
    xh = xh_ref[0]                                     # (C, halo_w)
    xw = jnp.concatenate([xm, xh], axis=-1)            # (C, tile_l + halo_w)

    if kernel_size > 1:
        taps = [xw[:, k:k + tile_l] for k in range(kernel_size)]
        cat = jnp.concatenate(taps, axis=0)            # (K*C, tile_l)
    else:
        cat = xm                                       # (C, tile_l)

    # One MXU push per tile; f32 accumulation regardless of operand dtype.
    acc = jnp.dot(w_ref[...], cat, preferred_element_type=jnp.float32)
    o_ref[0] = (acc + b_ref[...]).astype(o_ref.dtype)  # f32 bias epilogue


def upsample_conv_layer(x, weight, bias, *, stride=1, upsample=None,
                        tile_l_max=4096, compute_dtype=jnp.bfloat16):
    """Forward pass of UpsampleConvLayer (nearest upsample + Conv1d).

    x:      (N, C_in, L)       float32
    weight: (C_out, C_in, K)   float32
    bias:   (C_out,)           float32
    returns (N, C_out, L_out)  float32
    """
    N, C, L = x.shape
    O, C_in, K = weight.shape
    assert C_in == C and K >= 1

    p = K // 2
    up = int(upsample) if upsample else 1
    L_up = L * up
    L_out1 = L_up + 2 * p - K + 1          # stride-1 conv output length
    assert L_out1 >= 1

    # ---- lane tiling: multiples of 128, big, re-balanced to minimize tail ----
    tile_cap = max(128, (int(tile_l_max) // 128) * 128)
    tile_l = min(tile_cap, pl.cdiv(L_out1, 128) * 128)
    nt = pl.cdiv(L_out1, tile_l)
    tile_l = pl.cdiv(pl.cdiv(L_out1, nt), 128) * 128   # same #tiles, less waste
    halo_w = 128 * pl.cdiv(max(K - 1, 1), 128)
    if tile_l % halo_w:                                # keep halo blocks aligned
        tile_l = pl.cdiv(tile_l, halo_w) * halo_w
    num_l_tiles = pl.cdiv(L_out1, tile_l)
    ratio = tile_l // halo_w
    L_total = num_l_tiles * tile_l + halo_w

    # ---- nearest-upsample + conv zero-pad: one XLA fusion, bf16 storage ------
    x_c = x.astype(compute_dtype)
    x_rep = jnp.repeat(x_c, up, axis=-1) if up > 1 else x_c        # (N, C, L_up)
    right_pad = L_total - p - L_up
    assert right_pad >= 0
    x_g = jnp.pad(x_rep, ((0, 0), (0, 0), (p, right_pad)))         # (N, C, L_total)

    # Fused tap weights: w2[o, k*C + c] = weight[o, c, k]
    w2 = jnp.transpose(weight, (0, 2, 1)).reshape(O, K * C).astype(compute_dtype)
    b2 = bias.reshape(O, 1).astype(jnp.float32)

    kernel = functools.partial(_upsample_conv_kernel, kernel_size=K,
                               tile_l=tile_l)

    itemsize = jnp.dtype(compute_dtype).itemsize
    cost = pl.CostEstimate(
        flops=2 * N * L_out1 * O * K * C,
        transcendentals=0,
        bytes_accessed=(N * C * (L_total + num_l_tiles * halo_w) * itemsize
                        + O * K * C * itemsize + O * 4
                        + N * O * L_out1 * 4),
    )

    out = pl.pallas_call(
        kernel,
        out_shape=jax.ShapeDtypeStruct((N, O, L_out1), jnp.float32),
        grid_spec=pltpu.PrefetchScalarGridSpec(
            num_scalar_prefetch=0,
            grid=(num_l_tiles, N),
            in_specs=[
                # main aligned window
                pl.BlockSpec((1, C, tile_l), lambda j, n: (n, 0, j)),
                # right halo: the 128-wide chunk starting at (j+1)*tile_l
                pl.BlockSpec((1, C, halo_w),
                             lambda j, n: (n, 0, (j + 1) * ratio)),
                pl.BlockSpec((O, K * C), lambda j, n: (0, 0)),
                pl.BlockSpec((O, 1), lambda j, n: (0, 0)),
            ],
            out_specs=pl.BlockSpec((1, O, tile_l), lambda j, n: (n, 0, j)),
        ),
        compiler_params=pltpu.CompilerParams(
            dimension_semantics=("parallel", "parallel")),
        cost_estimate=cost,
    )(x_g, x_g, w2, b2)

    if stride == 1:
        return out
    return out[:, :, ::stride]


def _reference(x, weight, bias, *, stride, upsample):
    if upsample:
        x = jnp.repeat(x, int(upsample), axis=-1)
    K = weight.shape[-1]
    y = lax.conv_general_dilated(
        x, weight,
        window_strides=(stride,),
        padding=[(K // 2, K // 2)],
        dimension_numbers=("NCH", "OIH", "NCH"),
    )
    return y + bias[None, :, None]


if __name__ == "__main__":
    # module config: in_channels=4, out_channels=8, kernel_size=3, stride=1, upsample=2
    in_channels, out_channels, kernel_size = 4, 8, 3
    N, L = 2, 16

    key = jax.random.PRNGKey(0)
    kx, kw, kb = jax.random.split(key, 3)

    x = jax.random.normal(kx, (N, in_channels, L), dtype=jnp.float32)
    fan_in = in_channels * kernel_size
    bound = 1.0 / (fan_in ** 0.5)
    weight = jax.random.uniform(
        kw, (out_channels, in_channels, kernel_size),
        minval=-bound, maxval=bound, dtype=jnp.float32)
    bias = jax.random.uniform(
        kb, (out_channels,), minval=-bound, maxval=bound, dtype=jnp.float32)

    configs = [
        dict(stride=1, upsample=2),    # the canonical upsample-conv config
        dict(stride=1, upsample=None), # plain conv path (up == 1)
        dict(stride=2, upsample=2),    # strided path
    ]

    for cfg in configs:
        y_ref = _reference(x, weight, bias, **cfg)

        # bf16 operands (default) -- the production path.
        fwd = jax.jit(functools.partial(upsample_conv_layer, **cfg))
        y = fwd(x, weight, bias)
        jax.block_until_ready(y)
        assert y.shape == y_ref.shape, (cfg, y.shape, y_ref.shape)
        assert jnp.allclose(y, y_ref, atol=5e-2, rtol=5e-2), (
            cfg, float(jnp.max(jnp.abs(y - y_ref))))

        # f32 operands -- near-exactness check.
        fwd_f32 = jax.jit(functools.partial(
            upsample_conv_layer, compute_dtype=jnp.float32, **cfg))
        y32 = fwd_f32(x, weight, bias)
        jax.block_until_ready(y32)
        assert y32.shape == y_ref.shape, (cfg, y32.shape, y_ref.shape)
        assert jnp.allclose(y32, y_ref, atol=1e-4, rtol=1e-4), (
            cfg, float(jnp.max(jnp.abs(y32 - y_ref))))

    print("KERNEL_OK")
</pallas_src>

<mosaic_0001>
module attributes {stable_mosaic.version = 11 : i64} {
  func.func @_upsample_conv_kernel(%arg0: i32, %arg1: i32, %arg2: memref<1x4x128xbf16, #tpu.memory_space<vmem>>, %arg3: memref<1x4x128xbf16, #tpu.memory_space<vmem>>, %arg4: memref<8x12xbf16, #tpu.memory_space<vmem>>, %arg5: memref<8x1xf32, #tpu.memory_space<vmem>>, %arg6: memref<1x8x128xf32, #tpu.memory_space<vmem>>) attributes {dimension_semantics = [#tpu.dimension_semantics<parallel>, #tpu.dimension_semantics<parallel>], iteration_bounds = array<i64: 1, 2>, scalar_prefetch = 0 : i64, scratch_operands = 0 : i64, tpu.core_type = #tpu.core_type<tc>, window_params = [{transform_indices = @transform_0, window_bounds = array<i64: 1, 4, 128>}, {transform_indices = @transform_1, window_bounds = array<i64: 1, 4, 128>}, {pipeline_mode = #tpu.pipeline_mode<synchronous>, transform_indices = @transform_2, window_bounds = array<i64: 8, 12>}, {pipeline_mode = #tpu.pipeline_mode<synchronous>, transform_indices = @transform_3, window_bounds = array<i64: 8, 1>}, {transform_indices = @transform_4, window_bounds = array<i64: 1, 8, 128>}]} {
    %c0 = arith.constant 0 : index
    %c0_0 = arith.constant 0 : index
    %c0_1 = arith.constant 0 : index
    %0 = vector.load %arg2[%c0, %c0_0, %c0_1] : memref<1x4x128xbf16, #tpu.memory_space<vmem>>, vector<1x4x128xbf16>
    %1 = vector.shape_cast %0 : vector<1x4x128xbf16> to vector<4x128xbf16>
    %c0_2 = arith.constant 0 : index
    %c0_3 = arith.constant 0 : index
    %c0_4 = arith.constant 0 : index
    %2 = vector.load %arg3[%c0_2, %c0_3, %c0_4] : memref<1x4x128xbf16, #tpu.memory_space<vmem>>, vector<1x4x128xbf16>
    %3 = vector.shape_cast %2 : vector<1x4x128xbf16> to vector<4x128xbf16>
    %4 = tpu.concatenate %1, %3 in 1 : vector<4x128xbf16>, vector<4x128xbf16> -> vector<4x256xbf16>
    %5 = vector.extract_strided_slice %4 {offsets = [0, 0], sizes = [4, 128], strides = [1, 1]} : vector<4x256xbf16> to vector<4x128xbf16>
    %6 = vector.extract_strided_slice %4 {offsets = [0, 1], sizes = [4, 128], strides = [1, 1]} : vector<4x256xbf16> to vector<4x128xbf16>
    %7 = vector.extract_strided_slice %4 {offsets = [0, 2], sizes = [4, 128], strides = [1, 1]} : vector<4x256xbf16> to vector<4x128xbf16>
    %8 = tpu.concatenate %5, %6, %7 in 0 : vector<4x128xbf16>, vector<4x128xbf16>, vector<4x128xbf16> -> vector<12x128xbf16>
    %c0_5 = arith.constant 0 : index
    %c0_6 = arith.constant 0 : index
    %9 = vector.load %arg4[%c0_5, %c0_6] : memref<8x12xbf16, #tpu.memory_space<vmem>>, vector<8x12xbf16>
    %cst = arith.constant dense<0.000000e+00> : vector<8x128xf32>
    %10 = tpu.matmul %9, %8, %cst {dimension_numbers = #tpu.dot_dimension_numbers<[1], [0], [0], [1], [0, 0, 1, 1], [], []>} : vector<8x12xbf16>, vector<12x128xbf16>, vector<8x128xf32> -> vector<8x128xf32>
    %c0_7 = arith.constant 0 : index
    %c0_8 = arith.constant 0 : index
    %11 = vector.load %arg5[%c0_7, %c0_8] : memref<8x1xf32, #tpu.memory_space<vmem>>, vector<8x1xf32>
    %12 = vector.broadcast %11 : vector<8x1xf32> to vector<8x128xf32>
    %13 = arith.addf %10, %12 : vector<8x128xf32>
    %c0_9 = arith.constant 0 : index
    %c0_10 = arith.constant 0 : index
    %c0_11 = arith.constant 0 : index
    %14 = vector.load %arg6[%c0_9, %c0_10, %c0_11] : memref<1x8x128xf32, #tpu.memory_space<vmem>>, vector<1x8x128xf32>
    %15 = vector.shape_cast %14 : vector<1x8x128xf32> to vector<8x128xf32>
    %16 = vector.shape_cast %13 : vector<8x128xf32> to vector<1x8x128xf32>
    tpu.vector_store %arg6[%c0_9, %c0_10, %c0_11], %16 {strides = array<i32>} : memref<1x8x128xf32, #tpu.memory_space<vmem>>, vector<1x8x128xf32>,
    return
  }
  func.func @transform_0(%arg0: i32, %arg1: i32) -> (i32, i32, i32) {
    %c0_i32 = arith.constant 0 : i32
    %c0_i32_0 = arith.constant 0 : i32
    return %arg1, %c0_i32, %arg0 : i32, i32, i32
  }
  func.func @transform_1(%arg0: i32, %arg1: i32) -> (i32, i32, i32) {
    %c1_i32 = arith.constant 1 : i32
    %0 = arith.addi %arg0, %c1_i32 : i32
    %c1_i32_0 = arith.constant 1 : i32
    %1 = arith.muli %0, %c1_i32_0 : i32
    %c0_i32 = arith.constant 0 : i32
    %c0_i32_1 = arith.constant 0 : i32
    return %arg1, %c0_i32, %1 : i32, i32, i32
  }
  func.func @transform_2(%arg0: i32, %arg1: i32) -> (i32, i32) {
    %c0_i32 = arith.constant 0 : i32
    %c0_i32_0 = arith.constant 0 : i32
    %c0_i32_1 = arith.constant 0 : i32
    return %c0_i32, %c0_i32_0 : i32, i32
  }
  func.func @transform_3(%arg0: i32, %arg1: i32) -> (i32, i32) {
    %c0_i32 = arith.constant 0 : i32
    %c0_i32_0 = arith.constant 0 : i32
    %c0_i32_1 = arith.constant 0 : i32
    return %c0_i32, %c0_i32_0 : i32, i32
  }
  func.func @transform_4(%arg0: i32, %arg1: i32) -> (i32, i32, i32) {
    %c0_i32 = arith.constant 0 : i32
    %c0_i32_0 = arith.constant 0 : i32
    return %arg1, %c0_i32, %arg0 : i32, i32, i32
  }
}

</mosaic_0001>

<llo_original>
// kernel: upsample_conv_layer.1
$region0: #{upsample_conv_layer.1}
  #allocation0 [shape = 'u32[]', space=smem, size = 0x4, offset = 0x4, fixed_abs, tag = 'smem constant byte address 0x4 - core index']
  #allocation1 [shape = 'u32[144,128]{1,0:T(1,128)}', space=vmem, size = 0x12000, scoped, tag = 'internal scratch']
  %s0 = inlined_call_operand.vmem [shape: bf16[2,4,256], index: 0, kind: input, shape index: {}, may-alias: {0,1}]
  %s1 = inlined_call_operand.vmem [shape: bf16[2,4,256], index: 1, kind: input, shape index: {}, may-alias: {0,1}]
  %s2 = inlined_call_operand.vmem [shape: bf16[8,12], index: 2, kind: input, shape index: {}]
  %s3 = inlined_call_operand.vmem [shape: f32[8,1], index: 3, kind: input, shape index: {}]
  %s4 = inlined_call_operand.hbm [shape: f32[2,8,32], index: 4, kind: output, shape index: {}]
  %s5 = sld [smem:[#allocation0]]
  $region49: #{upsample_conv_layer.1} parent=0
    _
  %s7 = ssub.s32 1, %s5
  %s8 = scalar_select 0, %s7, %s5
  $region1: #{upsample_conv_layer.1} parent=0
    #allocation2 [shape = 'u8[8192]{0}', space=vmem, size = 0x2000, scoped, tag = 'output window, operand 0']
    #allocation3 [shape = 's32[2]{0}', space=sflag, size = 0x8, scoped, tag = 'scoped memory for upsample_conv_layer.1']
    %9 = vsyncpa [#allocation3], 0
    %s10 = scalar_lea.sflag [#allocation3], 1
    %11 = vsyncpa %s10, 0
    loop: start=0, step=1, limit=4
    $region2: #{upsample_conv_layer.1} parent=1 // loop_pre_header
      _
    $region3: #{upsample_conv_layer.1} parent=1 // loop_header
      %s13 = sphi 0, %s17
      %p14 = scmp.ge.s32.totalorder %s13, 4
      %s20 = sphi 0, %s32
      %s21 = sphi 0, %s28
      %s22 = sphi 0, %s20
      %s23 = sphi 0, %s21
      %s24 = sphi 0, %s22
      %s25 = sphi 0, %s23
      %s37 = sphi 0, %s39
      %s40 = sphi 0, %s37
      %s41 = sphi 0, %s40
      %s57 = sphi 0, %s41
      %s67 = sphi 0, %s69
      %s70 = sphi 0, %s67
      %s71 = sphi 0, %s70
      %s87 = sphi 0, %s71
      %s91 = sphi 0, %s91
      %s93 = sphi 0, %s91
      %s94 = sphi 0, %s93
      %s108 = sphi 0, %s94
      %s112 = sphi 0, %s112
      %s114 = sphi 0, %s112
      %s115 = sphi 0, %s114
      %s129 = sphi 0, %s115
      %s137 = sphi 0, %s139
      %s140 = sphi 0, %s137
      %s141 = sphi 0, %s140
      %s157 = sphi 0, %s141
    $region4: #{upsample_conv_layer.1} parent=1 // loop_header_branch
      %16 = sbr.rel (%p14) target = $region8
    $region5: #{upsample_conv_layer.1} parent=1 // loop_body
      %s18 = ssub.s32 %s13, 1
      %s19 = ssub.s32 %s13, 2
      %s26 = sadd.s32 1, %s21
      %p27 = scmp.ge.s32.totalorder %s26, 2
      %s28 = scalar_select %p27, 0, %s26
      %s29 = sadd.s32 1, %s20
      %s30 = scalar_select %p27, %s29, %s20
      %p31 = scmp.ge.s32.totalorder %s30, 1
      %s32 = scalar_select %p31, 0, %s30
      %s33 = ssub.s32 %s21, %s28
      %s34 = ssub.s32 %s20, %s32
      %s35 = sor.u32 %s33, %s34
      %p36 = scmp.eq.s32.totalorder %s35, 0
      %s38 = sadd.s32 %s37, 1
      %s39 = scalar_select %p36, %s37, %s38
      %p42 = pneg %p36
      %p43 = scmp.eq.s32.totalorder %s13, 1
      %p44 = por %p42, %p43
      %p45 = scmp.ne.s32.totalorder %s37, %s40
      %p46 = scmp.eq.s32.totalorder %s13, 0
      %p47 = por %p45, %p46
      %p48 = scmp.ne.s32.totalorder %s37, %s40
      %p49 = scmp.eq.s32.totalorder %s18, 1
      %p50 = por %p48, %p49
      %p51 = scmp.ne.s32.totalorder %s40, %s41
      %p52 = scmp.eq.s32.totalorder %s18, 0
      %p53 = por %p51, %p52
      %p54 = scmp.ne.s32.totalorder %s40, %s41
      %p55 = scmp.eq.s32.totalorder %s19, 1
      %p56 = por %p54, %p55
      %p58 = scmp.ne.s32.totalorder %s41, %s57
      %p59 = scmp.eq.s32.totalorder %s19, 0
      %p60 = por %p58, %p59
      %s61 = sadd.s32 %s20, 1
      %s62 = sadd.s32 %s32, 1
      %s63 = ssub.s32 %s21, %s28
      %s64 = ssub.s32 %s61, %s62
      %s65 = sor.u32 %s63, %s64
      %p66 = scmp.eq.s32.totalorder %s65, 0
      %s68 = sadd.s32 %s67, 1
      %s69 = scalar_select %p66, %s67, %s68
      %p72 = pneg %p66
      %p73 = scmp.eq.s32.totalorder %s13, 1
      %p74 = por %p72, %p73
      %p75 = scmp.ne.s32.totalorder %s67, %s70
      %p76 = scmp.eq.s32.totalorder %s13, 0
      %p77 = por %p75, %p76
      %p78 = scmp.ne.s32.totalorder %s67, %s70
      %p79 = scmp.eq.s32.totalorder %s18, 1
      %p80 = por %p78, %p79
      %p81 = scmp.ne.s32.totalorder %s70, %s71
      %p82 = scmp.eq.s32.totalorder %s18, 0
      %p83 = por %p81, %p82
      %p84 = scmp.ne.s32.totalorder %s70, %s71
      %p85 = scmp.eq.s32.totalorder %s19, 1
      %p86 = por %p84, %p85
      %p88 = scmp.ne.s32.totalorder %s71, %s87
      %p89 = scmp.eq.s32.totalorder %s19, 0
      %p90 = por %p88, %p89
      %s92 = sadd.s32 %s91, 1
      %p95 = scmp.eq.s32.totalorder %s13, 1
      %p96 = scmp.ne.s32.totalorder %s91, %s93
      %p97 = scmp.eq.s32.totalorder %s13, 0
      %p98 = por %p96, %p97
      %p99 = scmp.ne.s32.totalorder %s91, %s93
      %p100 = scmp.eq.s32.totalorder %s18, 1
      %p101 = por %p99, %p100
      %p102 = scmp.ne.s32.totalorder %s93, %s94
      %p103 = scmp.eq.s32.totalorder %s18, 0
      %p104 = por %p102, %p103
      %p105 = scmp.ne.s32.totalorder %s93, %s94
      %p106 = scmp.eq.s32.totalorder %s19, 1
      %p107 = por %p105, %p106
      %p109 = scmp.ne.s32.totalorder %s94, %s108
      %p110 = scmp.eq.s32.totalorder %s19, 0
      %p111 = por %p109, %p110
      %s113 = sadd.s32 %s112, 1
      %p116 = scmp.eq.s32.totalorder %s13, 1
      %p117 = scmp.ne.s32.totalorder %s112, %s114
      %p118 = scmp.eq.s32.totalorder %s13, 0
      %p119 = por %p117, %p118
      %p120 = scmp.ne.s32.totalorder %s112, %s114
      %p121 = scmp.eq.s32.totalorder %s18, 1
      %p122 = por %p120, %p121
      %p123 = scmp.ne.s32.totalorder %s114, %s115
      %p124 = scmp.eq.s32.totalorder %s18, 0
      %p125 = por %p123, %p124
      %p126 = scmp.ne.s32.totalorder %s114, %s115
      %p127 = scmp.eq.s32.totalorder %s19, 1
      %p128 = por %p126, %p127
      %p130 = scmp.ne.s32.totalorder %s115, %s129
      %p131 = scmp.eq.s32.totalorder %s19, 0
      %p132 = por %p130, %p131
      %s133 = ssub.s32 %s21, %s28
      %s134 = ssub.s32 %s20, %s32
      %s135 = sor.u32 %s133, %s134
      %p136 = scmp.eq.s32.totalorder %s135, 0
      %s138 = sadd.s32 %s137, 1
      %s139 = scalar_select %p136, %s137, %s138
      %p142 = pneg %p136
      %p143 = scmp.eq.s32.totalorder %s13, 1
      %p144 = por %p142, %p143
      %p145 = scmp.ne.s32.totalorder %s137, %s140
      %p146 = scmp.eq.s32.totalorder %s13, 0
      %p147 = por %p145, %p146
      %p148 = scmp.ne.s32.totalorder %s137, %s140
      %p149 = scmp.eq.s32.totalorder %s18, 1
      %p150 = por %p148, %p149
      %p151 = scmp.ne.s32.totalorder %s140, %s141
      %p152 = scmp.eq.s32.totalorder %s18, 0
      %p153 = por %p151, %p152
      %p154 = scmp.ne.s32.totalorder %s140, %s141
      %p155 = scmp.eq.s32.totalorder %s19, 1
      %p156 = por %p154, %p155
      %p158 = scmp.ne.s32.totalorder %s141, %s157
      %p159 = scmp.eq.s32.totalorder %s19, 0
      %p160 = por %p158, %p159
      %p161 = scmp.le.s32.totalorder 1, %s13
      %p162 = scmp.lt.s32.totalorder %s13, 3
      %p163 = pnand %p161, %p162
      %p164 = pneg %p163
      // Predicated region
      $region9: #{upsample_conv_layer.1} parent=5 // pred_check
        _
      $region10: #{upsample_conv_layer.1} parent=5 // pred_check_branch
        %166 = sbr.rel (%p163) target = $region12
      $region11: #{upsample_conv_layer.1} parent=5 // pred_region
        %s167 = ssub.s32 %s13, 1
        // Predicated region
        $region13: #{upsample_conv_layer.1} parent=11 // pred_check
          %p168 = pneg %p104
        $region14: #{upsample_conv_layer.1} parent=11 // pred_check_branch
          %170 = sbr.rel (%p168) target = $region16
        $region15: #{upsample_conv_layer.1} parent=11 // pred_region
          _
        $region16: #{upsample_conv_layer.1} parent=11 // pred_fallthru
          _
        // Predicated region
        $region17: #{upsample_conv_layer.1} parent=11 // pred_check
          %p171 = pneg %p125
        $region18: #{upsample_conv_layer.1} parent=11 // pred_check_branch
          %173 = sbr.rel (%p171) target = $region20
        $region19: #{upsample_conv_layer.1} parent=11 // pred_region
          _
        $region20: #{upsample_conv_layer.1} parent=11 // pred_fallthru
          _
      $region12: #{upsample_conv_layer.1} parent=5 // pred_fallthru
        _
      %p174 = scmp.lt.s32.totalorder %s13, 2
      // Predicated region
      $region21: #{upsample_conv_layer.1} parent=5 // pred_check
        %p175 = pneg %p174
      $region22: #{upsample_conv_layer.1} parent=5 // pred_check_branch
        %177 = sbr.rel (%p175) target = $region24
      $region23: #{upsample_conv_layer.1} parent=5 // pred_region
        // Predicated region
        $region25: #{upsample_conv_layer.1} parent=23 // pred_check
          %p178 = pneg %p47
        $region26: #{upsample_conv_layer.1} parent=23 // pred_check_branch
          %180 = sbr.rel (%p178) target = $region28
        $region27: #{upsample_conv_layer.1} parent=23 // pred_region
          %p181 = scmp.lt.s32.totalorder %s21, 1
          %s182 = scalar_select %p181, %s21, 1
          %p183 = scmp.lt.s32.totalorder %s20, 1
          %s184 = scalar_select %p183, %s20, 1
          %s185 = smul.addr %s182, 2
          %s186 = sadd.s32 %s184, %s185
          %s187 = smul.addr %s186, 2
          %s188 = scalar_lea.vmem %s0, %s187
        $region28: #{upsample_conv_layer.1} parent=23 // pred_fallthru
          _
        // Predicated region
        $region29: #{upsample_conv_layer.1} parent=23 // pred_check
          %p189 = pneg %p77
        $region30: #{upsample_conv_layer.1} parent=23 // pred_check_branch
          %191 = sbr.rel (%p189) target = $region32
        $region31: #{upsample_conv_layer.1} parent=23 // pred_region
          %s192 = sadd.s32 %s20, 1
          %p193 = scmp.lt.s32.totalorder %s21, 1
          %s194 = scalar_select %p193, %s21, 1
          %p195 = scmp.lt.s32.totalorder %s192, 1
          %s196 = scalar_select %p195, %s192, 1
          %s197 = smul.addr %s194, 2
          %s198 = sadd.s32 %s196, %s197
          %s199 = smul.addr %s198, 2
          %s200 = scalar_lea.vmem %s1, %s199
          %s201 = sadd.s32 %s20, 1
        $region32: #{upsample_conv_layer.1} parent=23 // pred_fallthru
          _
      $region24: #{upsample_conv_layer.1} parent=5 // pred_fallthru
        _
      %p202 = scmp.le.s32.totalorder 1, %s13
      %p203 = scmp.lt.s32.totalorder %s13, 3
      %p204 = pnand %p202, %p203
      %p205 = pneg %p204
      // Predicated region
      $region33: #{upsample_conv_layer.1} parent=5 // pred_check
        _
      $region34: #{upsample_conv_layer.1} parent=5 // pred_check_branch
        %207 = sbr.rel (%p204) target = $region36
      $region35: #{upsample_conv_layer.1} parent=5 // pred_region
        %s208 = ssub.s32 %s13, 1
        %p209 = scmp.lt.s32.totalorder %s23, 1
        %s210 = scalar_select %p209, %s23, 1
        %p211 = scmp.lt.s32.totalorder %s22, 1
        %s212 = scalar_select %p211, %s22, 1
        %s213 = smul.addr %s210, 2
        %s214 = sadd.s32 %s212, %s213
        %s215 = smul.addr %s214, 2
        %s216 = scalar_lea.vmem %s0, %s215
        %p217 = pneg %p53
        %p218 = pneg %p50
        %s219 = sadd.s32 %s22, 1
        %p220 = scmp.lt.s32.totalorder %s23, 1
        %s221 = scalar_select %p220, %s23, 1
        %p222 = scmp.lt.s32.totalorder %s219, 1
        %s223 = scalar_select %p222, %s219, 1
        %s224 = smul.addr %s221, 2
        %s225 = sadd.s32 %s223, %s224
        %s226 = smul.addr %s225, 2
        %s227 = scalar_lea.vmem %s1, %s226
        %p228 = pneg %p83
        %p229 = pneg %p80
        %p230 = pneg %p104
        %p231 = pneg %p101
        %p232 = pneg %p125
        %p233 = pneg %p122
        %p234 = pneg %p153
        %p235 = pneg %p150
        %s236 = sand.u32 %s140, 1
        %s237 = scalar_lea.sflag [#allocation3], %s236
        %s238 = sand.u32 %s140, 1
        %s239 = smul.addr %s238, 8
        %s240 = scalar_lea.vmem [#allocation2], %s239
        %p241 = scmp.lt.s32.totalorder %s23, 1
        %s242 = scalar_select %p241, %s23, 1
        %p243 = scmp.lt.s32.totalorder %s22, 1
        %s244 = scalar_select %p243, %s22, 1
        %s245 = smul.addr %s242, 2
        %s246 = sadd.s32 %s244, %s245
        %s247 = smul.addr %s246, 2
        %s248 = scalar_lea.vmem %s0, %s247
        %s249 = sadd.s32 %s22, 1
        %p250 = scmp.lt.s32.totalorder %s23, 1
        %s251 = scalar_select %p250, %s23, 1
        %p252 = scmp.lt.s32.totalorder %s249, 1
        %s253 = scalar_select %p252, %s249, 1
        %s254 = smul.addr %s251, 2
        %s255 = sadd.s32 %s253, %s254
        %s256 = smul.addr %s255, 2
        %s257 = scalar_lea.vmem %s1, %s256
        %s258 = sadd.s32 %s22, 1
        %v260 = vld [vmem:[%s248] sm:$0x3]
        %v261 = vld [vmem:[%s257] sm:$0x3]
        %v264 = vrot.slane %v260, 6
        %v265 = vrot.slane %v261, 6
        %266 = vrot.lane.b32.xlu0 %v264, 127
        %v267 = vpop.permute.xlu0 %266
        %268 = vrot.lane.b32.xlu0 %v265, 127
        %v269 = vpop.permute.xlu0 %268
        %vm270 = vcmask 1039360
        %v271 = vsel %vm270, %v267, %v269
        %v272 = vrot.slane %v260, 4
        %v273 = vrot.slane %v261, 4
        %274 = vrot.lane.b32.xlu0 %v272, 126
        %v275 = vpop.permute.xlu0 %274
        %276 = vrot.lane.b32.xlu0 %v273, 126
        %v277 = vpop.permute.xlu0 %276
        %vm278 = vcmask 1031168
        %v279 = vsel %vm278, %v275, %v277
        %vm280 = vcmask 1041408
        %v283 = vsel %vm280, %v260, %v271
        %vm284 = vcmask 1043456
        %v286 = vsel %vm284, %v283, %v279
        %v287 = vld [vmem:[%s2] sm:$0xf]
        %v288 = vld [vmem:[%s3] sm:$0xff]
        %290 = vset.pattern.permute.xlu0 0
        %291 = vperm.xlu0 %290, %v288
        %v292 = vpop.permute.xlu0 %291
        %vm294 = vcmask 97280
        %v296 = vsel %vm294, %v287, 0
        %vm298 = vcmask 1045504
        %v299 = vsel %vm298, %v286, 0
        %301 = vmatprep.subr.bf16.mxu0 0
        %302 = vmatpush1.bf16.msra.mxu0 0
        %303 = vmatprep.subr.bf16.mxu0 0
        %304 = vmatpush1.bf16.msra.mxu0 0
        %305 = vmatprep.subr.bf16.mxu0 0
        %306 = vmatpush1.bf16.msra.mxu0 0
        %307 = vmatprep.subr.bf16.mxu0 0
        %308 = vmatpush1.bf16.msra.mxu0 0
        %309 = vmatprep.subr.bf16.mxu0 0
        %310 = vmatpush1.bf16.msra.mxu0 0
        %311 = vmatprep.subr.bf16.mxu0 0
        %312 = vmatpush1.bf16.msra.mxu0 0
        %313 = vmatprep.subr.bf16.mxu0 0
        %314 = vmatpush1.bf16.msra.mxu0 0
        %315 = vmatprep.subr.bf16.mxu0 0
        %316 = vmatpush1.bf16.msra.mxu0 %v299
        %317 = vmatprep.subr.bf16.mxu0 0
        %318 = vmatpush2.bf16.msra.mxu0 0
        %319 = vmatprep.subr.bf16.mxu0 0
        %320 = vmatpush2.bf16.msra.mxu0 0
        %321 = vmatprep.subr.bf16.mxu0 0
        %322 = vmatpush2.bf16.msra.mxu0 0
        %323 = vmatprep.subr.bf16.mxu0 0
        %324 = vmatpush2.bf16.msra.mxu0 0
        %325 = vmatprep.subr.bf16.mxu0 0
        %326 = vmatpush2.bf16.msra.mxu0 0
        %327 = vmatprep.subr.bf16.mxu0 0
        %328 = vmatpush2.bf16.msra.mxu0 0
        %329 = vmatprep.subr.bf16.mxu0 0
        %330 = vmatpush2.bf16.msra.mxu0 0
        %331 = vmatprep.subr.bf16.mxu0 0
        %332 = vmatpush2.bf16.msra.mxu0 0
        %333 = vmatprep.mubr.bf16.mxu0 0
        %334 = vmatmul.mubr.bf16.gmra.mxu0 %v296
        %v335 = vpop.f32.mrf.mxu0
        %v336 = vadd.f32 %v292, %v335
        %v337 = vpop.f32.mrf.mxu0
        %v338 = vpop.f32.mrf.mxu0
        %v339 = vpop.f32.mrf.mxu0
        %340 = vdwg.mxu0
        %341 = vst [vmem:[%s240] sm:$0xff] %v336
        %s342 = sand.u32 %s140, 1
        %s343 = scalar_lea.sflag [#allocation3], %s342
        %s344 = sand.u32 %s140, 1
        %s345 = smul.addr %s344, 8
        %s346 = scalar_lea.vmem [#allocation2], %s345
        // Predicated region
        $region37: #{upsample_conv_layer.1} parent=35 // pred_check
          %p347 = pneg %p150
        $region38: #{upsample_conv_layer.1} parent=35 // pred_check_branch
          %349 = sbr.rel (%p347) target = $region40
        $region39: #{upsample_conv_layer.1} parent=35 // pred_region
          %s351 = ssub.s32 128, 128
          %352 = vsyncadd %s343, %s351
          %s353 = sadd.s32 %s22, %s23
          %s354 = smul.addr %s353, 128
          %s355 = scalar_lea.hbm %s4, %s354
          %s357 = sshll.u32 %s346, 4
          %s358 = int_to_ptr.vmem [resolvable:$true] %s357
          %360 = dma.vmem_to_hbm [thread:$0]  %s358, 128, %s355, %s343
        $region40: #{upsample_conv_layer.1} parent=35 // pred_fallthru
          _
      $region36: #{upsample_conv_layer.1} parent=5 // pred_fallthru
        _
      %p361 = scmp.le.s32.totalorder 2, %s13
      // Predicated region
      $region41: #{upsample_conv_layer.1} parent=5 // pred_check
        %p362 = pneg %p361
      $region42: #{upsample_conv_layer.1} parent=5 // pred_check_branch
        %364 = sbr.rel (%p362) target = $region44
      $region43: #{upsample_conv_layer.1} parent=5 // pred_region
        %s365 = ssub.s32 %s13, 2
        // Predicated region
        $region45: #{upsample_conv_layer.1} parent=43 // pred_check
          %p366 = pneg %p156
        $region46: #{upsample_conv_layer.1} parent=43 // pred_check_branch
          %368 = sbr.rel (%p366) target = $region48
        $region47: #{upsample_conv_layer.1} parent=43 // pred_region
          %s369 = sand.u32 %s141, 1
          %s370 = scalar_lea.sflag [#allocation3], %s369
          %s371 = sand.u32 %s141, 1
          %s372 = smul.addr %s371, 8
          %s373 = scalar_lea.vmem [#allocation2], %s372
          %374 = dma.done %s370, 128
        $region48: #{upsample_conv_layer.1} parent=43 // pred_fallthru
          _
      $region44: #{upsample_conv_layer.1} parent=5 // pred_fallthru
        _
    $region6: #{upsample_conv_layer.1} parent=1 // loop_footer
      %s17 = sadd.s32 1, %s13
    $region7: #{upsample_conv_layer.1} parent=1 // loop_footer_branch
      %12 = sbr.rel target = $region3
    $region8: #{upsample_conv_layer.1} parent=1 // loop_exit
      _
    %375 = vsyncpa [#allocation3], 1
    %s376 = scalar_lea.sflag [#allocation3], 1
    %377 = vsyncpa %s376, 1

</llo_original>
